<compile_context>
chip_gen: v7x
topology: tpu7x:2x2x1
jax: 0.10.0
libtpu: 0.0.40
codegen_flags: <defaults>
</compile_context>

<pallas_src>
import functools

import jax
import jax.numpy as jnp
from jax.experimental import pallas as pl
from jax.experimental.pallas import tpu as pltpu


HIDDEN = 64      # logical hidden width (matches nn.Linear(hidden_dim=64))
MAX_TM = 2048    # rows per grid block (multiple of 8); big blocks amortize overhead


def _round_up(x: int, m: int) -> int:
    return ((x + m - 1) // m) * m


def policy_kernel(x_ref, w1_ref, b1_ref, w2_ref, b2_ref, w3_ref, b3_ref, o_ref):
    x = x_ref[...]

    # fc1 + relu   (MXU matmul, f32 accumulate; bias broadcast on VPU)
    h1 = jnp.dot(x, w1_ref[...], preferred_element_type=jnp.float32) + b1_ref[...]
    h1 = jnp.maximum(h1, 0.0)

    # fc2 + relu + residual
    h2 = jnp.dot(h1, w2_ref[...], preferred_element_type=jnp.float32) + b2_ref[...]
    h2 = jnp.maximum(h2, 0.0) + h1

    # fc3 (logits) -> direct (TM, D+1) store (full-extent last dim)
    o_ref[...] = (
        jnp.dot(h2, w3_ref[...], preferred_element_type=jnp.float32) + b3_ref[...]
    ).astype(o_ref.dtype)


@functools.partial(jax.jit, static_argnames=("max_tm",))
def policy_forward(x, params, *, max_tm: int = MAX_TM):
    """x: (B, D) float32. params: dict of w1,b1,w2,b2,w3,b3 (logical shapes)."""
    B, D = x.shape
    out_dim = D + 1

    # Rows per block: multiple of 8 sublanes, capped at max_tm.  Ragged last
    # block (B not a multiple of TM) is handled by Pallas: OOB reads are
    # garbage rows whose outputs are dropped on writeback.
    TM = min(max_tm, _round_up(B, 8))
    n_blocks = pl.cdiv(B, TM)

    # Weights/biases: constant index_map -> loaded once, VMEM-resident.
    def const(shape):
        return pl.BlockSpec(shape, lambda i: tuple(0 for _ in shape))

    flops = 2 * B * (D * HIDDEN + HIDDEN * HIDDEN + HIDDEN * out_dim)
    bytes_accessed = 4 * (
        B * D + B * out_dim                       # activations in / logits out
        + D * HIDDEN + HIDDEN                     # fc1
        + HIDDEN * HIDDEN + HIDDEN                # fc2
        + HIDDEN * out_dim + out_dim              # fc3
    )

    return pl.pallas_call(
        policy_kernel,
        out_shape=jax.ShapeDtypeStruct((B, out_dim), jnp.float32),
        grid=(n_blocks,),
        in_specs=[
            pl.BlockSpec((TM, D), lambda i: (i, 0)),      # x: tiled over batch
            const((D, HIDDEN)), const((1, HIDDEN)),       # fc1
            const((HIDDEN, HIDDEN)), const((1, HIDDEN)),  # fc2
            const((HIDDEN, out_dim)), const((1, out_dim)),# fc3
        ],
        out_specs=pl.BlockSpec((TM, out_dim), lambda i: (i, 0)),
        compiler_params=pltpu.CompilerParams(
            dimension_semantics=("parallel",),            # megacore-shard batch axis
            vmem_limit_bytes=32 * 1024 * 1024,
        ),
        cost_estimate=pl.CostEstimate(
            flops=flops, transcendentals=0, bytes_accessed=bytes_accessed
        ),
    )(
        x,
        params["w1"], params["b1"],
        params["w2"], params["b2"],
        params["w3"], params["b3"],
    )


def init_params(key, input_dim):
    """Deterministic init matching nn.Linear shapes (uniform(-1/sqrt(fan_in), ..)).

    Weights are stored as (in_features, out_features) so the kernel computes
    y = x @ W + b directly (transpose of PyTorch's layout; same semantics).
    """
    out_dim = input_dim + 1
    ks = jax.random.split(key, 6)

    def linear(kw, kb, fan_in, fan_out):
        bound = 1.0 / jnp.sqrt(fan_in)
        w = jax.random.uniform(kw, (fan_in, fan_out), jnp.float32, -bound, bound)
        b = jax.random.uniform(kb, (1, fan_out), jnp.float32, -bound, bound)
        return w, b

    w1, b1 = linear(ks[0], ks[1], input_dim, HIDDEN)
    w2, b2 = linear(ks[2], ks[3], HIDDEN, HIDDEN)
    w3, b3 = linear(ks[4], ks[5], HIDDEN, out_dim)
    return {"w1": w1, "b1": b1, "w2": w2, "b2": b2, "w3": w3, "b3": b3}


def policy_forward_ref(x, p):
    h1 = jnp.maximum(x @ p["w1"] + p["b1"], 0.0)
    h2 = jnp.maximum(h1 @ p["w2"] + p["b2"], 0.0) + h1
    return h2 @ p["w3"] + p["b3"]


# TODO(synk): masked_softmax / Categorical sampling (select_action, dists) are
# host-side policy utilities outside Module.forward and are not ported here.


if __name__ == "__main__":
    key = jax.random.PRNGKey(0)
    k_param, k_x = jax.random.split(key)

    batch = 8
    input_dim = 64  # e.g. board_size=8 -> states of shape (B, 64)

    params = init_params(k_param, input_dim)
    x = jax.random.normal(k_x, (batch, input_dim), jnp.float32)

    out = policy_forward(x, params)
    out = jax.block_until_ready(out)

    ref = policy_forward_ref(x, params)
    assert out.shape == (batch, input_dim + 1)
    assert jnp.allclose(out, ref, atol=1e-4, rtol=1e-4)

    # Multi-block batch with a ragged last block (exercises grid > 1 and the
    # dropped OOB writeback path): B=1500, TM forced to 512 -> 3 blocks.
    big_B = 1500
    xb = jax.random.normal(jax.random.PRNGKey(1), (big_B, input_dim), jnp.float32)
    out_b = jax.block_until_ready(policy_forward(xb, params, max_tm=512))
    ref_b = policy_forward_ref(xb, params)
    assert out_b.shape == (big_B, input_dim + 1)
    assert jnp.allclose(out_b, ref_b, atol=1e-4, rtol=1e-4)

    print("KERNEL_OK")
</pallas_src>

<mosaic_0001>
module attributes {stable_mosaic.version = 11 : i64} {
  func.func @policy_kernel(%arg0: i32, %arg1: memref<8x64xf32, #tpu.memory_space<vmem>>, %arg2: memref<64x64xf32, #tpu.memory_space<vmem>>, %arg3: memref<1x64xf32, #tpu.memory_space<vmem>>, %arg4: memref<64x64xf32, #tpu.memory_space<vmem>>, %arg5: memref<1x64xf32, #tpu.memory_space<vmem>>, %arg6: memref<64x65xf32, #tpu.memory_space<vmem>>, %arg7: memref<1x65xf32, #tpu.memory_space<vmem>>, %arg8: memref<8x65xf32, #tpu.memory_space<vmem>>) attributes {dimension_semantics = [#tpu.dimension_semantics<parallel>], iteration_bounds = array<i64: 1>, scalar_prefetch = 0 : i64, scratch_operands = 0 : i64, tpu.core_type = #tpu.core_type<tc>, window_params = [{transform_indices = @transform_0, window_bounds = array<i64: 8, 64>}, {pipeline_mode = #tpu.pipeline_mode<synchronous>, transform_indices = @transform_1, window_bounds = array<i64: 64, 64>}, {pipeline_mode = #tpu.pipeline_mode<synchronous>, transform_indices = @transform_2, window_bounds = array<i64: 1, 64>}, {pipeline_mode = #tpu.pipeline_mode<synchronous>, transform_indices = @transform_3, window_bounds = array<i64: 64, 64>}, {pipeline_mode = #tpu.pipeline_mode<synchronous>, transform_indices = @transform_4, window_bounds = array<i64: 1, 64>}, {pipeline_mode = #tpu.pipeline_mode<synchronous>, transform_indices = @transform_5, window_bounds = array<i64: 64, 65>}, {pipeline_mode = #tpu.pipeline_mode<synchronous>, transform_indices = @transform_6, window_bounds = array<i64: 1, 65>}, {transform_indices = @transform_7, window_bounds = array<i64: 8, 65>}]} {
    %c0 = arith.constant 0 : index
    %c0_0 = arith.constant 0 : index
    %0 = vector.load %arg1[%c0, %c0_0] : memref<8x64xf32, #tpu.memory_space<vmem>>, vector<8x64xf32>
    %c0_1 = arith.constant 0 : index
    %c0_2 = arith.constant 0 : index
    %1 = vector.load %arg2[%c0_1, %c0_2] : memref<64x64xf32, #tpu.memory_space<vmem>>, vector<64x64xf32>
    %cst = arith.constant dense<0.000000e+00> : vector<8x64xf32>
    %2 = tpu.matmul %0, %1, %cst {dimension_numbers = #tpu.dot_dimension_numbers<[1], [0], [0], [1], [0, 0, 1, 1], [], []>} : vector<8x64xf32>, vector<64x64xf32>, vector<8x64xf32> -> vector<8x64xf32>
    %c0_3 = arith.constant 0 : index
    %c0_4 = arith.constant 0 : index
    %3 = vector.load %arg3[%c0_3, %c0_4] : memref<1x64xf32, #tpu.memory_space<vmem>>, vector<1x64xf32>
    %4 = vector.broadcast %3 : vector<1x64xf32> to vector<8x64xf32>
    %5 = arith.addf %2, %4 : vector<8x64xf32>
    %cst_5 = arith.constant 0.000000e+00 : f32
    %6 = vector.broadcast %cst_5 : f32 to vector<8x64xf32>
    %7 = arith.maximumf %5, %6 : vector<8x64xf32>
    %c0_6 = arith.constant 0 : index
    %c0_7 = arith.constant 0 : index
    %8 = vector.load %arg4[%c0_6, %c0_7] : memref<64x64xf32, #tpu.memory_space<vmem>>, vector<64x64xf32>
    %cst_8 = arith.constant dense<0.000000e+00> : vector<8x64xf32>
    %9 = tpu.matmul %7, %8, %cst_8 {dimension_numbers = #tpu.dot_dimension_numbers<[1], [0], [0], [1], [0, 0, 1, 1], [], []>} : vector<8x64xf32>, vector<64x64xf32>, vector<8x64xf32> -> vector<8x64xf32>
    %c0_9 = arith.constant 0 : index
    %c0_10 = arith.constant 0 : index
    %10 = vector.load %arg5[%c0_9, %c0_10] : memref<1x64xf32, #tpu.memory_space<vmem>>, vector<1x64xf32>
    %11 = vector.broadcast %10 : vector<1x64xf32> to vector<8x64xf32>
    %12 = arith.addf %9, %11 : vector<8x64xf32>
    %cst_11 = arith.constant 0.000000e+00 : f32
    %13 = vector.broadcast %cst_11 : f32 to vector<8x64xf32>
    %14 = arith.maximumf %12, %13 : vector<8x64xf32>
    %15 = arith.addf %14, %7 : vector<8x64xf32>
    %c0_12 = arith.constant 0 : index
    %c0_13 = arith.constant 0 : index
    %16 = vector.load %arg6[%c0_12, %c0_13] : memref<64x65xf32, #tpu.memory_space<vmem>>, vector<64x65xf32>
    %cst_14 = arith.constant dense<0.000000e+00> : vector<8x65xf32>
    %17 = tpu.matmul %15, %16, %cst_14 {dimension_numbers = #tpu.dot_dimension_numbers<[1], [0], [0], [1], [0, 0, 1, 1], [], []>} : vector<8x64xf32>, vector<64x65xf32>, vector<8x65xf32> -> vector<8x65xf32>
    %c0_15 = arith.constant 0 : index
    %c0_16 = arith.constant 0 : index
    %18 = vector.load %arg7[%c0_15, %c0_16] : memref<1x65xf32, #tpu.memory_space<vmem>>, vector<1x65xf32>
    %19 = vector.broadcast %18 : vector<1x65xf32> to vector<8x65xf32>
    %20 = arith.addf %17, %19 : vector<8x65xf32>
    %c0_17 = arith.constant 0 : index
    %c0_18 = arith.constant 0 : index
    %21 = vector.load %arg8[%c0_17, %c0_18] : memref<8x65xf32, #tpu.memory_space<vmem>>, vector<8x65xf32>
    tpu.vector_store %arg8[%c0_17, %c0_18], %20 {strides = array<i32>} : memref<8x65xf32, #tpu.memory_space<vmem>>, vector<8x65xf32>,
    return
  }
  func.func @transform_0(%arg0: i32) -> (i32, i32) {
    %c0_i32 = arith.constant 0 : i32
    %c0_i32_0 = arith.constant 0 : i32
    return %arg0, %c0_i32 : i32, i32
  }
  func.func @transform_1(%arg0: i32) -> (i32, i32) {
    %c0_i32 = arith.constant 0 : i32
    %c0_i32_0 = arith.constant 0 : i32
    %c0_i32_1 = arith.constant 0 : i32
    return %c0_i32, %c0_i32_0 : i32, i32
  }
  func.func @transform_2(%arg0: i32) -> (i32, i32) {
    %c0_i32 = arith.constant 0 : i32
    %c0_i32_0 = arith.constant 0 : i32
    %c0_i32_1 = arith.constant 0 : i32
    return %c0_i32, %c0_i32_0 : i32, i32
  }
  func.func @transform_3(%arg0: i32) -> (i32, i32) {
    %c0_i32 = arith.constant 0 : i32
    %c0_i32_0 = arith.constant 0 : i32
    %c0_i32_1 = arith.constant 0 : i32
    return %c0_i32, %c0_i32_0 : i32, i32
  }
  func.func @transform_4(%arg0: i32) -> (i32, i32) {
    %c0_i32 = arith.constant 0 : i32
    %c0_i32_0 = arith.constant 0 : i32
    %c0_i32_1 = arith.constant 0 : i32
    return %c0_i32, %c0_i32_0 : i32, i32
  }
  func.func @transform_5(%arg0: i32) -> (i32, i32) {
    %c0_i32 = arith.constant 0 : i32
    %c0_i32_0 = arith.constant 0 : i32
    %c0_i32_1 = arith.constant 0 : i32
    return %c0_i32, %c0_i32_0 : i32, i32
  }
  func.func @transform_6(%arg0: i32) -> (i32, i32) {
    %c0_i32 = arith.constant 0 : i32
    %c0_i32_0 = arith.constant 0 : i32
    %c0_i32_1 = arith.constant 0 : i32
    return %c0_i32, %c0_i32_0 : i32, i32
  }
  func.func @transform_7(%arg0: i32) -> (i32, i32) {
    %c0_i32 = arith.constant 0 : i32
    %c0_i32_0 = arith.constant 0 : i32
    return %arg0, %c0_i32 : i32, i32
  }
}

</mosaic_0001>

<llo_original>
// kernel: policy_forward.1
$region0: #{policy_forward.1}
  #allocation0 [shape = 'u32[]', space=smem, size = 0x4, offset = 0x4, fixed_abs, tag = 'smem constant byte address 0x4 - core index']
  #allocation1 [shape = 'u32[144,128]{1,0:T(1,128)}', space=vmem, size = 0x12000, scoped, tag = 'internal scratch']
  %s0 = inlined_call_operand.hbm [shape: f32[8,64], index: 0, kind: input, shape index: {}]
  %s1 = inlined_call_operand.hbm [shape: f32[64,64], index: 1, kind: input, shape index: {}]
  %s2 = inlined_call_operand.vmem [shape: f32[1,64], index: 2, kind: input, shape index: {}]
  %s3 = inlined_call_operand.hbm [shape: f32[64,64], index: 3, kind: input, shape index: {}]
  %s4 = inlined_call_operand.vmem [shape: f32[1,64], index: 4, kind: input, shape index: {}]
  %s5 = inlined_call_operand.hbm [shape: f32[64,65], index: 5, kind: input, shape index: {}]
  %s6 = inlined_call_operand.vmem [shape: f32[1,65], index: 6, kind: input, shape index: {}]
  %s7 = inlined_call_operand.hbm [shape: f32[8,65], index: 7, kind: output, shape index: {}]
  %s8 = sld [smem:[#allocation0]]
  $region54: #{policy_forward.1} parent=0
    _
  %s10 = ssub.s32 1, %s8
  %s11 = scalar_select 0, %s10, %s8
  $region1: #{policy_forward.1} parent=0
    #allocation2 [shape = 'u8[4096]{0}', space=vmem, size = 0x1000, scoped, tag = 'input window, operand 0, single buffered']
    #allocation3 [shape = 's32[1]{0}', space=sflag, size = 0x4, scoped, tag = 'scoped memory for policy_forward.1']
    #allocation4 [shape = 's32[1]{0}', space=sflag, size = 0x4, scoped, tag = 'scoped memory for policy_forward.1']
    #allocation5 [shape = 'u8[32768]{0}', space=vmem, size = 0x8000, scoped, tag = 'input window, operand 1, single buffered']
    #allocation6 [shape = 's32[1]{0}', space=sflag, size = 0x4, scoped, tag = 'scoped memory for policy_forward.1']
    #allocation7 [shape = 'u8[32768]{0}', space=vmem, size = 0x8000, scoped, tag = 'input window, operand 3, single buffered']
    #allocation8 [shape = 'u8[32768]{0}', space=vmem, size = 0x8000, scoped, tag = 'input window, operand 5, single buffered']
    #allocation9 [shape = 's32[1]{0}', space=sflag, size = 0x4, scoped, tag = 'scoped memory for policy_forward.1']
    #allocation10 [shape = 'u8[4096]{0}', space=vmem, size = 0x1000, scoped, tag = 'output window, operand 0, single buffered']
    %12 = vsyncpa [#allocation3], 0
    %13 = vsyncpa [#allocation6], 0
    %14 = vsyncpa [#allocation9], 0
    %15 = vsyncpa [#allocation4], 0
    // Predicated region
    $region2: #{policy_forward.1} parent=1 // pred_check
      _
    $region3: #{policy_forward.1} parent=1 // pred_check_branch
      %17 = sbr.rel (0) target = $region5
    $region4: #{policy_forward.1} parent=1 // pred_region
      %s19 = ssub.s32 128, 128
      %20 = vsyncadd [#allocation3], %s19
      %s22 = sshll.u32 [#allocation2], 4
      %s23 = int_to_ptr.vmem [resolvable:$true] %s22
      %25 = dma.hbm_to_vmem [thread:$0]  %s0, 128, %s23, [#allocation3]
    $region5: #{policy_forward.1} parent=1 // pred_fallthru
      _
    // Predicated region
    $region6: #{policy_forward.1} parent=1 // pred_check
      _
    $region7: #{policy_forward.1} parent=1 // pred_check_branch
      %27 = sbr.rel (0) target = $region9
    $region8: #{policy_forward.1} parent=1 // pred_region
      %s29 = ssub.s32 1024, 1024
      %30 = vsyncadd [#allocation6], %s29
      %s31 = sshll.u32 [#allocation5], 4
      %s32 = int_to_ptr.vmem [resolvable:$true] %s31
      %37 = dma.hbm_to_vmem [thread:$0]  %s1, 1024, %s32, [#allocation6], 128, 128, 8
    $region9: #{policy_forward.1} parent=1 // pred_fallthru
      _
    // Predicated region
    $region10: #{policy_forward.1} parent=1 // pred_check
      _
    $region11: #{policy_forward.1} parent=1 // pred_check_branch
      %39 = sbr.rel (0) target = $region13
    $region12: #{policy_forward.1} parent=1 // pred_region
      _
    $region13: #{policy_forward.1} parent=1 // pred_fallthru
      _
    // Predicated region
    $region14: #{policy_forward.1} parent=1 // pred_check
      _
    $region15: #{policy_forward.1} parent=1 // pred_check_branch
      %41 = sbr.rel (0) target = $region17
    $region16: #{policy_forward.1} parent=1 // pred_region
      %s43 = ssub.s32 1024, 1024
      %44 = vsyncadd [#allocation6], %s43
      %s45 = sshll.u32 [#allocation7], 4
      %s46 = int_to_ptr.vmem [resolvable:$true] %s45
      %51 = dma.hbm_to_vmem [thread:$0]  %s3, 1024, %s46, [#allocation6], 128, 128, 8
    $region17: #{policy_forward.1} parent=1 // pred_fallthru
      _
    // Predicated region
    $region18: #{policy_forward.1} parent=1 // pred_check
      _
    $region19: #{policy_forward.1} parent=1 // pred_check_branch
      %53 = sbr.rel (0) target = $region21
    $region20: #{policy_forward.1} parent=1 // pred_region
      _
    $region21: #{policy_forward.1} parent=1 // pred_fallthru
      _
    // Predicated region
    $region22: #{policy_forward.1} parent=1 // pred_check
      _
    $region23: #{policy_forward.1} parent=1 // pred_check_branch
      %55 = sbr.rel (0) target = $region25
    $region24: #{policy_forward.1} parent=1 // pred_region
      %s57 = ssub.s32 1024, 1024
      %58 = vsyncadd [#allocation9], %s57
      %s59 = sshll.u32 [#allocation8], 4
      %s60 = int_to_ptr.vmem [resolvable:$true] %s59
      %65 = dma.hbm_to_vmem [thread:$0]  %s5, 1024, %s60, [#allocation9], 128, 128, 8
    $region25: #{policy_forward.1} parent=1 // pred_fallthru
      _
    // Predicated region
    $region26: #{policy_forward.1} parent=1 // pred_check
      _
    $region27: #{policy_forward.1} parent=1 // pred_check_branch
      %67 = sbr.rel (0) target = $region29
    $region28: #{policy_forward.1} parent=1 // pred_region
      _
    $region29: #{policy_forward.1} parent=1 // pred_fallthru
      _
    // Predicated region
    $region30: #{policy_forward.1} parent=1 // pred_check
      _
    $region31: #{policy_forward.1} parent=1 // pred_check_branch
      %69 = sbr.rel (0) target = $region33
    $region32: #{policy_forward.1} parent=1 // pred_region
      %70 = dma.done [#allocation3], 128
    $region33: #{policy_forward.1} parent=1 // pred_fallthru
      _
    // Predicated region
    $region34: #{policy_forward.1} parent=1 // pred_check
      _
    $region35: #{policy_forward.1} parent=1 // pred_check_branch
      %72 = sbr.rel (0) target = $region37
    $region36: #{policy_forward.1} parent=1 // pred_region
      %73 = dma.done [#allocation6], 1024
    $region37: #{policy_forward.1} parent=1 // pred_fallthru
      _
    // Predicated region
    $region38: #{policy_forward.1} parent=1 // pred_check
      _
    $region39: #{policy_forward.1} parent=1 // pred_check_branch
      %75 = sbr.rel (0) target = $region41
    $region40: #{policy_forward.1} parent=1 // pred_region
      %76 = dma.done [#allocation6], 1024
    $region41: #{policy_forward.1} parent=1 // pred_fallthru
      _
    // Predicated region
    $region42: #{policy_forward.1} parent=1 // pred_check
      _
    $region43: #{policy_forward.1} parent=1 // pred_check_branch
      %78 = sbr.rel (0) target = $region45
    $region44: #{policy_forward.1} parent=1 // pred_region
      %79 = dma.done [#allocation9], 1024
    $region45: #{policy_forward.1} parent=1 // pred_fallthru
      _
    %v80 = vld [vmem:[#allocation2] sm:$0xff]
    %v81 = vld [vmem:[#allocation5] sm:$0xff]
    %v82 = vld [vmem:[#allocation5 + $0x8] sm:$0xff]
    %v83 = vld [vmem:[#allocation5 + $0x10] sm:$0xff]
    %v84 = vld [vmem:[#allocation5 + $0x18] sm:$0xff]
    %v85 = vld [vmem:[#allocation5 + $0x20] sm:$0xff]
    %v86 = vld [vmem:[#allocation5 + $0x28] sm:$0xff]
    %v87 = vld [vmem:[#allocation5 + $0x30] sm:$0xff]
    %v88 = vld [vmem:[#allocation5 + $0x38] sm:$0xff]
    %v89 = vld [vmem:[%s2] sm:$0x1]
    %v91 = vlaneseq
    %v92 = vshrl.u32 %v91, 7
    %v93 = vsub.s32 0, %v92
    %v94 = vrot.slane %v89, %v93
    %vm96 = vcmask 523264
    %v98 = vsel %vm96, %v80, 0
    %100 = vmatprep.subr.mxu0 0.0
    %101 = vmatpush1.msra.mxu0 %v81
    %102 = vmatprep.subr.mxu0 0.0
    %103 = vmatpush1.msra.mxu0 %v82
    %104 = vmatprep.subr.mxu0 0.0
    %105 = vmatpush1.msra.mxu0 %v83
    %106 = vmatprep.subr.mxu0 0.0
    %107 = vmatpush1.msra.mxu0 %v84
    %108 = vmatprep.subr.mxu0 0.0
    %109 = vmatpush1.msra.mxu0 %v85
    %110 = vmatprep.subr.mxu0 0.0
    %111 = vmatpush1.msra.mxu0 %v86
    %112 = vmatprep.subr.mxu0 0.0
    %113 = vmatpush1.msra.mxu0 %v87
    %114 = vmatprep.subr.mxu0 0.0
    %115 = vmatpush1.msra.mxu0 %v88
    %116 = vmatprep.subr.mxu0 0.0
    %117 = vmatpush1.msra.mxu0 0.0
    %118 = vmatprep.subr.mxu0 0.0
    %119 = vmatpush1.msra.mxu0 0.0
    %120 = vmatprep.subr.mxu0 0.0
    %121 = vmatpush1.msra.mxu0 0.0
    %122 = vmatprep.subr.mxu0 0.0
    %123 = vmatpush1.msra.mxu0 0.0
    %124 = vmatprep.subr.mxu0 0.0
    %125 = vmatpush1.msra.mxu0 0.0
    %126 = vmatprep.subr.mxu0 0.0
    %127 = vmatpush1.msra.mxu0 0.0
    %128 = vmatprep.subr.mxu0 0.0
    %129 = vmatpush1.msra.mxu0 0.0
    %130 = vmatprep.subr.mxu0 0.0
    %131 = vmatpush1.msra.mxu0 0.0
    %132 = vmatprep.subr.mxu0 0.0
    %133 = vmatpush1.msra.mxu0 0.0
    %134 = vmatprep.subr.mxu0 0.0
    %135 = vmatpush1.msra.mxu0 0.0
    %136 = vmatprep.subr.mxu0 0.0
    %137 = vmatpush1.msra.mxu0 0.0
    %138 = vmatprep.subr.mxu0 0.0
    %139 = vmatpush1.msra.mxu0 0.0
    %140 = vmatprep.subr.mxu0 0.0
    %141 = vmatpush1.msra.mxu0 0.0
    %142 = vmatprep.subr.mxu0 0.0
    %143 = vmatpush1.msra.mxu0 0.0
    %144 = vmatprep.subr.mxu0 0.0
    %145 = vmatpush1.msra.mxu0 0.0
    %146 = vmatprep.subr.mxu0 0.0
    %147 = vmatpush1.msra.mxu0 0.0
    %148 = vmatprep.subr.mxu0 0.0
    %149 = vmatpush1.msra.mxu0 0.0
    %150 = vmatprep.subr.mxu0 0.0
    %151 = vmatpush1.msra.mxu0 0.0
    %152 = vmatprep.subr.mxu0 0.0
    %153 = vmatpush1.msra.mxu0 0.0
    %154 = vmatprep.subr.mxu0 0.0
    %155 = vmatpush1.msra.mxu0 0.0
    %156 = vmatprep.subr.mxu0 0.0
    %157 = vmatpush1.msra.mxu0 0.0
    %158 = vmatprep.subr.mxu0 0.0
    %159 = vmatpush1.msra.mxu0 0.0
    %160 = vmatprep.subr.mxu0 0.0
    %161 = vmatpush1.msra.mxu0 0.0
    %162 = vmatprep.subr.mxu0 0.0
    %163 = vmatpush1.msra.mxu0 0.0
    %164 = vmatprep.mubr.f32.mxu0 0.0
    %165 = vmatmul.mubr.f32.gmra.mrb[0].mxu0 %v98
    %v166 = vpop.f32.mrb[0].mxu0
    %v167 = vadd.f32 %v94, %v166
    %v168 = vpop.f32.mrb[0].mxu0
    %169 = vdwg.mxu0
    %v170 = vmax.f32 %v167, 0.0
    %v171 = vld [vmem:[#allocation7] sm:$0xff]
    %v172 = vld [vmem:[#allocation7 + $0x8] sm:$0xff]
    %v173 = vld [vmem:[#allocation7 + $0x10] sm:$0xff]
    %v174 = vld [vmem:[#allocation7 + $0x18] sm:$0xff]
    %v175 = vld [vmem:[#allocation7 + $0x20] sm:$0xff]
    %v176 = vld [vmem:[#allocation7 + $0x28] sm:$0xff]
    %v177 = vld [vmem:[#allocation7 + $0x30] sm:$0xff]
    %v178 = vld [vmem:[#allocation7 + $0x38] sm:$0xff]
    %v179 = vld [vmem:[%s4] sm:$0x1]
    %v181 = vlaneseq
    %v182 = vshrl.u32 %v181, 7
    %v183 = vsub.s32 0, %v182
    %v184 = vrot.slane %v179, %v183
    %v187 = vsel %vm96, %v170, 0
    %189 = vmatprep.subr.mxu0 0.0
    %190 = vmatpush1.msra.mxu0 %v171
    %191 = vmatprep.subr.mxu0 0.0
    %192 = vmatpush1.msra.mxu0 %v172
    %193 = vmatprep.subr.mxu0 0.0
    %194 = vmatpush1.msra.mxu0 %v173
    %195 = vmatprep.subr.mxu0 0.0
    %196 = vmatpush1.msra.mxu0 %v174
    %197 = vmatprep.subr.mxu0 0.0
    %198 = vmatpush1.msra.mxu0 %v175
    %199 = vmatprep.subr.mxu0 0.0
    %200 = vmatpush1.msra.mxu0 %v176
    %201 = vmatprep.subr.mxu0 0.0
    %202 = vmatpush1.msra.mxu0 %v177
    %203 = vmatprep.subr.mxu0 0.0
    %204 = vmatpush1.msra.mxu0 %v178
    %205 = vmatprep.subr.mxu0 0.0
    %206 = vmatpush1.msra.mxu0 0.0
    %207 = vmatprep.subr.mxu0 0.0
    %208 = vmatpush1.msra.mxu0 0.0
    %209 = vmatprep.subr.mxu0 0.0
    %210 = vmatpush1.msra.mxu0 0.0
    %211 = vmatprep.subr.mxu0 0.0
    %212 = vmatpush1.msra.mxu0 0.0
    %213 = vmatprep.subr.mxu0 0.0
    %214 = vmatpush1.msra.mxu0 0.0
    %215 = vmatprep.subr.mxu0 0.0
    %216 = vmatpush1.msra.mxu0 0.0
    %217 = vmatprep.subr.mxu0 0.0
    %218 = vmatpush1.msra.mxu0 0.0
    %219 = vmatprep.subr.mxu0 0.0
    %220 = vmatpush1.msra.mxu0 0.0
    %221 = vmatprep.subr.mxu0 0.0
    %222 = vmatpush1.msra.mxu0 0.0
    %223 = vmatprep.subr.mxu0 0.0
    %224 = vmatpush1.msra.mxu0 0.0
    %225 = vmatprep.subr.mxu0 0.0
    %226 = vmatpush1.msra.mxu0 0.0
    %227 = vmatprep.subr.mxu0 0.0
    %228 = vmatpush1.msra.mxu0 0.0
    %229 = vmatprep.subr.mxu0 0.0
    %230 = vmatpush1.msra.mxu0 0.0
    %231 = vmatprep.subr.mxu0 0.0
    %232 = vmatpush1.msra.mxu0 0.0
    %233 = vmatprep.subr.mxu0 0.0
    %234 = vmatpush1.msra.mxu0 0.0
    %235 = vmatprep.subr.mxu0 0.0
    %236 = vmatpush1.msra.mxu0 0.0
    %237 = vmatprep.subr.mxu0 0.0
    %238 = vmatpush1.msra.mxu0 0.0
    %239 = vmatprep.subr.mxu0 0.0
    %240 = vmatpush1.msra.mxu0 0.0
    %241 = vmatprep.subr.mxu0 0.0
    %242 = vmatpush1.msra.mxu0 0.0
    %243 = vmatprep.subr.mxu0 0.0
    %244 = vmatpush1.msra.mxu0 0.0
    %245 = vmatprep.subr.mxu0 0.0
    %246 = vmatpush1.msra.mxu0 0.0
    %247 = vmatprep.subr.mxu0 0.0
    %248 = vmatpush1.msra.mxu0 0.0
    %249 = vmatprep.subr.mxu0 0.0
    %250 = vmatpush1.msra.mxu0 0.0
    %251 = vmatprep.subr.mxu0 0.0
    %252 = vmatpush1.msra.mxu0 0.0
    %253 = vmatprep.mubr.f32.mxu0 0.0
    %254 = vmatmul.mubr.f32.gmra.mrb[0].mxu0 %v187
    %v255 = vpop.f32.mrb[0].mxu0
    %v256 = vadd.f32 %v184, %v255
    %v257 = vpop.f32.mrb[0].mxu0
    %258 = vdwg.mxu0
    %v259 = vmax.f32 %v256, 0.0
    %v260 = vadd.f32 %v259, %v170
    %v261 = vld [vmem:[#allocation8] sm:$0xff]
    %v262 = vld [vmem:[#allocation8 + $0x8] sm:$0xff]
    %v263 = vld [vmem:[#allocation8 + $0x10] sm:$0xff]
    %v264 = vld [vmem:[#allocation8 + $0x18] sm:$0xff]
    %v265 = vld [vmem:[#allocation8 + $0x20] sm:$0xff]
    %v266 = vld [vmem:[#allocation8 + $0x28] sm:$0xff]
    %v267 = vld [vmem:[#allocation8 + $0x30] sm:$0xff]
    %v268 = vld [vmem:[#allocation8 + $0x38] sm:$0xff]
    %v269 = vld [vmem:[%s6] sm:$0x1]
    %v271 = vlaneseq
    %v272 = vshrl.u32 %v271, 7
    %v273 = vsub.s32 0, %v272
    %v274 = vrot.slane %v269, %v273
    %v277 = vsel %vm96, %v260, 0
    %279 = vmatprep.subr.mxu0 0.0
    %280 = vmatpush1.msra.mxu0 %v261
    %281 = vmatprep.subr.mxu0 0.0
    %282 = vmatpush1.msra.mxu0 %v262
    %283 = vmatprep.subr.mxu0 0.0
    %284 = vmatpush1.msra.mxu0 %v263
    %285 = vmatprep.subr.mxu0 0.0
    %286 = vmatpush1.msra.mxu0 %v264
    %287 = vmatprep.subr.mxu0 0.0
    %288 = vmatpush1.msra.mxu0 %v265
    %289 = vmatprep.subr.mxu0 0.0
    %290 = vmatpush1.msra.mxu0 %v266
    %291 = vmatprep.subr.mxu0 0.0
    %292 = vmatpush1.msra.mxu0 %v267
    %293 = vmatprep.subr.mxu0 0.0
    %294 = vmatpush1.msra.mxu0 %v268
    %295 = vmatprep.subr.mxu0 0.0
    %296 = vmatpush1.msra.mxu0 0.0
    %297 = vmatprep.subr.mxu0 0.0
    %298 = vmatpush1.msra.mxu0 0.0
    %299 = vmatprep.subr.mxu0 0.0
    %300 = vmatpush1.msra.mxu0 0.0
    %301 = vmatprep.subr.mxu0 0.0
    %302 = vmatpush1.msra.mxu0 0.0
    %303 = vmatprep.subr.mxu0 0.0
    %304 = vmatpush1.msra.mxu0 0.0
    %305 = vmatprep.subr.mxu0 0.0
    %306 = vmatpush1.msra.mxu0 0.0
    %307 = vmatprep.subr.mxu0 0.0
    %308 = vmatpush1.msra.mxu0 0.0
    %309 = vmatprep.subr.mxu0 0.0
    %310 = vmatpush1.msra.mxu0 0.0
    %311 = vmatprep.subr.mxu0 0.0
    %312 = vmatpush1.msra.mxu0 0.0
    %313 = vmatprep.subr.mxu0 0.0
    %314 = vmatpush1.msra.mxu0 0.0
    %315 = vmatprep.subr.mxu0 0.0
    %316 = vmatpush1.msra.mxu0 0.0
    %317 = vmatprep.subr.mxu0 0.0
    %318 = vmatpush1.msra.mxu0 0.0
    %319 = vmatprep.subr.mxu0 0.0
    %320 = vmatpush1.msra.mxu0 0.0
    %321 = vmatprep.subr.mxu0 0.0
    %322 = vmatpush1.msra.mxu0 0.0
    %323 = vmatprep.subr.mxu0 0.0
    %324 = vmatpush1.msra.mxu0 0.0
    %325 = vmatprep.subr.mxu0 0.0
    %326 = vmatpush1.msra.mxu0 0.0
    %327 = vmatprep.subr.mxu0 0.0
    %328 = vmatpush1.msra.mxu0 0.0
    %329 = vmatprep.subr.mxu0 0.0
    %330 = vmatpush1.msra.mxu0 0.0
    %331 = vmatprep.subr.mxu0 0.0
    %332 = vmatpush1.msra.mxu0 0.0
    %333 = vmatprep.subr.mxu0 0.0
    %334 = vmatpush1.msra.mxu0 0.0
    %335 = vmatprep.subr.mxu0 0.0
    %336 = vmatpush1.msra.mxu0 0.0
    %337 = vmatprep.subr.mxu0 0.0
    %338 = vmatpush1.msra.mxu0 0.0
    %339 = vmatprep.subr.mxu0 0.0
    %340 = vmatpush1.msra.mxu0 0.0
    %341 = vmatprep.subr.mxu0 0.0
    %342 = vmatpush1.msra.mxu0 0.0
    %343 = vmatprep.mubr.f32.mxu0 0.0
    %344 = vmatmul.mubr.f32.gmra.mrb[0].mxu0 %v277
    %v345 = vpop.f32.mrb[0].mxu0
    %v346 = vadd.f32 %v274, %v345
    %v347 = vpop.f32.mrb[0].mxu0
    %348 = vdwg.mxu0
    %vm349 = vcmask 531456
    %350 = vst.msk [vmem:[#allocation10] sm:$0xff] %vm349, %v346
    // Predicated region
    $region46: #{policy_forward.1} parent=1 // pred_check
      _
    $region47: #{policy_forward.1} parent=1 // pred_check_branch
      %352 = sbr.rel (0) target = $region49
    $region48: #{policy_forward.1} parent=1 // pred_region
      %s354 = ssub.s32 128, 128
      %355 = vsyncadd [#allocation4], %s354
      %s357 = sshll.u32 [#allocation10], 4
      %s358 = int_to_ptr.vmem [resolvable:$true] %s357
      %360 = dma.vmem_to_hbm [thread:$0]  %s358, 128, %s7, [#allocation4]
    $region49: #{policy_forward.1} parent=1 // pred_fallthru
      _
    // Predicated region
    $region50: #{policy_forward.1} parent=1 // pred_check
      _
    $region51: #{policy_forward.1} parent=1 // pred_check_branch
      %362 = sbr.rel (0) target = $region53
    $region52: #{policy_forward.1} parent=1 // pred_region
      %363 = dma.done [#allocation4], 128
    $region53: #{policy_forward.1} parent=1 // pred_fallthru
      _
    %364 = vsyncpa [#allocation3], 1
    %365 = vsyncpa [#allocation6], 1
    %366 = vsyncpa [#allocation9], 1
    %367 = vsyncpa [#allocation4], 1

</llo_original>
